<compile_context>
chip_gen: v7x
topology: tpu7x:2x2x1
jax: 0.10.0
libtpu: 0.0.40
codegen_flags: <defaults>
</compile_context>

<pallas_src>
import functools

import jax
import jax.numpy as jnp
from jax.experimental import pallas as pl
from jax.experimental.pallas import tpu as pltpu


# ----------------------------- one-time prep --------------------------------

def prepare_moe_linear(W, b, *, compute_dtype=None, pad_lanes=False):
    """One-time parameter preparation (call at load time, NOT per step).

    Args:
      W: (num_encoders, in_features, out_features) weights.
      b: (num_encoders, 1, out_features) bias.
      compute_dtype: optional MXU operand dtype (e.g. jnp.bfloat16; valid on
        v5e/v6e/v7x). Cast here once so the per-call path never re-reads /
        re-writes W in HBM. Accumulation and bias add stay fp32.
      pad_lanes: zero-pad out_features up to a multiple of 128 so every kernel
        store is an unmasked, lane-dense vst. Default False: for out_f < 128
        the padding multiplies W HBM traffic by 128/out_f, which is worse than
        the (in-kernel, store-slot-only) cost of masked stores.

    Returns:
      (W_prep, b_prep, out_features)
    """
    k, in_f, out_f = W.shape
    assert b.shape == (k, 1, out_f), "bias shape mismatch"
    if pad_lanes and out_f % 128 != 0:
        o_pad = ((out_f + 127) // 128) * 128
        W = jnp.pad(W, ((0, 0), (0, 0), (0, o_pad - out_f)))
        b = jnp.pad(b, ((0, 0), (0, 0), (0, o_pad - out_f)))
    if compute_dtype is not None:
        W = W.astype(compute_dtype)
    b = b.astype(jnp.float32)  # bias add stays fp32 on every generation
    return W, b, out_f


# ------------------------------ tile picking ---------------------------------

def _divisors(n):
    return [d for d in range(1, n + 1) if n % d == 0]


def _pick_tiles(k, in_f, o_pad, batch, w_isz, x_isz, o_isz, shared_x,
                budget_bytes=24 << 20, max_kb=16):
    """Pick (encoders-per-step kb, out_f tile to).

    Keeps the double-buffered per-step working set under `budget_bytes`
    (safe for v7x's 64 MiB physical VMEM) and makes the grid have >= 2 steps
    whenever possible so v7x's two TensorCores are both used.
    """
    # Lane-dense out_f tiles (multiples of 128) or the full extent as fallback.
    o_cands = [d for d in _divisors(o_pad) if d % 128 == 0] or [o_pad]

    def step_bytes(kb, to):
        wb = kb * in_f * to * w_isz
        bb = kb * to * 4
        ob = kb * batch * to * o_isz
        xb = (batch * in_f * x_isz) if shared_x else (kb * batch * in_f * x_isz)
        return 2 * (wb + bb + ob + xb)  # BlockSpec double-buffers each ref

    kb, to = 1, min(o_cands)
    for cand_to in sorted(o_cands, reverse=True):
        fits = [d for d in _divisors(k)
                if d <= max_kb and step_bytes(d, cand_to) <= budget_bytes]
        if fits:
            kb, to = max(fits), cand_to
            break

    # Never leave a v7x TensorCore idle: prefer >= 2 grid steps if possible.
    if (k // kb) * (o_pad // to) < 2:
        if k >= 2:
            kb = max(d for d in _divisors(k) if d <= k // 2)
        else:
            halves = [d for d in o_cands if d <= o_pad // 2]
            if halves:
                to = max(halves)

    return kb, to, step_bytes(kb, to)


# -------------------------------- kernels ------------------------------------

def _moe_kernel_shared_x(x_ref, w_ref, b_ref, o_ref, *, kb):
    # x_ref: (batch, in_f)  -- shared across encoders, resident across the grid.
    # w_ref: (kb, in_f, to), b_ref: (kb, 1, to), o_ref: (kb, batch, to)
    x = x_ref[...]                                       # hoisted out of the loop
    for kk in range(kb):                                 # static unroll: kb MXU dots
        acc = jnp.dot(x, w_ref[kk], preferred_element_type=jnp.float32)
        o_ref[kk] = (acc + b_ref[kk]).astype(o_ref.dtype)  # direct aligned store


def _moe_kernel_per_enc_x(x_ref, w_ref, b_ref, o_ref, *, kb):
    # x_ref: (kb, batch, in_f) -- one input slab per encoder.
    for kk in range(kb):
        acc = jnp.dot(x_ref[kk], w_ref[kk], preferred_element_type=jnp.float32)
        o_ref[kk] = (acc + b_ref[kk]).astype(o_ref.dtype)


# -------------------------------- wrapper ------------------------------------

@functools.partial(jax.jit, static_argnames=("out_features",))
def moe_linear(x, W, b, *, out_features=None):
    """Mixture-of-Encoders parallel linear layer (forward).

    Args:
      x: (batch, in_features) shared input, or
         (num_encoders, batch, in_features) per-encoder input.
      W: (num_encoders, in_features, out_features[_padded]) weights, ideally
         from `prepare_moe_linear` (raw fp32 parameters also work).
      b: (num_encoders, 1, out_features[_padded]) fp32 bias.
      out_features: logical out_features (needed when W/b were lane-padded).

    Returns:
      (num_encoders, batch, out_features)
    """
    k, in_f, o_pad = W.shape
    out_f = int(out_features) if out_features is not None else o_pad
    out_dtype = jnp.result_type(x.dtype, W.dtype)

    shared_x = (x.ndim == 2)
    if shared_x:
        batch, xi = x.shape
    else:
        assert x.ndim == 3, "x must be rank 2 or 3"
        xk, batch, xi = x.shape
        assert xk == k, "num_encoders mismatch"
    assert xi == in_f, "in_features mismatch"

    # Only x (which changes every call and is small at encoder batch sizes) is
    # cast per call; W was cast once in prepare_moe_linear.
    xc = x.astype(W.dtype) if x.dtype != W.dtype else x

    kb, to, step_bytes = _pick_tiles(
        k, in_f, o_pad, batch,
        jnp.dtype(W.dtype).itemsize, jnp.dtype(xc.dtype).itemsize,
        jnp.dtype(out_dtype).itemsize, shared_x)
    grid = (k // kb, o_pad // to)

    w_spec = pl.BlockSpec((kb, in_f, to), lambda ki, oi: (ki, 0, oi))
    b_spec = pl.BlockSpec((kb, 1, to), lambda ki, oi: (ki, 0, oi))
    o_spec = pl.BlockSpec((kb, batch, to), lambda ki, oi: (ki, 0, oi))
    if shared_x:
        x_spec = pl.BlockSpec((batch, in_f), lambda ki, oi: (0, 0))  # resident
        kernel = functools.partial(_moe_kernel_shared_x, kb=kb)
    else:
        x_spec = pl.BlockSpec((kb, batch, in_f), lambda ki, oi: (ki, 0, 0))
        kernel = functools.partial(_moe_kernel_per_enc_x, kb=kb)

    bytes_accessed = (xc.size * xc.dtype.itemsize
                      + W.size * W.dtype.itemsize
                      + b.size * b.dtype.itemsize
                      + k * batch * o_pad * jnp.dtype(out_dtype).itemsize)
    vmem_limit = int(min(max(step_bytes + (8 << 20), 32 << 20), 48 << 20))

    out = pl.pallas_call(
        kernel,
        out_shape=jax.ShapeDtypeStruct((k, batch, o_pad), out_dtype),
        grid_spec=pltpu.PrefetchScalarGridSpec(
            num_scalar_prefetch=0,
            grid=grid,
            in_specs=[x_spec, w_spec, b_spec],
            out_specs=o_spec,
        ),
        compiler_params=pltpu.CompilerParams(
            dimension_semantics=("parallel", "parallel"),
            vmem_limit_bytes=vmem_limit),
        cost_estimate=pl.CostEstimate(
            flops=2 * k * batch * in_f * o_pad,
            transcendentals=0,
            bytes_accessed=bytes_accessed),
    )(xc, W, b)

    if out_f != o_pad:
        # Lane-padded weights were used; drop the zero columns. (Consumers that
        # can work with the padded layout should skip this slice.)
        out = out[:, :, :out_f]
    return out


# --------------------------------- test --------------------------------------

if __name__ == "__main__":
    num_encoders = 4
    batch = 8
    in_features = 32
    out_features = 32

    key = jax.random.PRNGKey(0)
    k_w, k_b, k_x2, k_x3 = jax.random.split(key, 4)

    # torch.randn-equivalent parameter init.
    W = jax.random.normal(k_w, (num_encoders, in_features, out_features),
                          dtype=jnp.float32)
    bias = jax.random.normal(k_b, (num_encoders, 1, out_features),
                             dtype=jnp.float32)
    x2 = jax.random.normal(k_x2, (batch, in_features), dtype=jnp.float32)
    x3 = jax.random.normal(k_x3, (num_encoders, batch, in_features),
                           dtype=jnp.float32)

    ref2 = jnp.einsum("kio,bi->kbo", W, x2) + bias
    ref3 = jnp.einsum("kio,kbi->kbo", W, x3) + bias

    # fp32, natural (k,i,o) weight layout: no per-call weight transform and the
    # kernel writes (k, b, o) directly (no post-kernel transpose).
    Wp, bp, of = prepare_moe_linear(W, bias)
    out2 = jax.block_until_ready(moe_linear(x2, Wp, bp, out_features=of))
    out3 = jax.block_until_ready(moe_linear(x3, Wp, bp, out_features=of))
    assert out2.shape == (num_encoders, batch, out_features)
    assert out3.shape == (num_encoders, batch, out_features)
    assert jnp.allclose(out2, ref2, atol=1e-5, rtol=1e-5)
    assert jnp.allclose(out3, ref3, atol=1e-5, rtol=1e-5)

    # Lane-padded variant (every store unmasked; optional, costs extra W bytes).
    Wq, bq, of_q = prepare_moe_linear(W, bias, pad_lanes=True)
    out2p = jax.block_until_ready(moe_linear(x2, Wq, bq, out_features=of_q))
    out3p = jax.block_until_ready(moe_linear(x3, Wq, bq, out_features=of_q))
    assert jnp.allclose(out2p, ref2, atol=1e-5, rtol=1e-5)
    assert jnp.allclose(out3p, ref3, atol=1e-5, rtol=1e-5)

    # bf16 operands (cast once at prepare time), fp32 accumulation + bias add.
    Wb, bb, of_b = prepare_moe_linear(W, bias, compute_dtype=jnp.bfloat16)
    out3b = jax.block_until_ready(moe_linear(x3, Wb, bb, out_features=of_b))
    assert out3b.shape == (num_encoders, batch, out_features)
    assert bool(jnp.all(jnp.isfinite(out3b)))
    assert jnp.allclose(out3b.astype(jnp.float32), ref3, atol=0.5, rtol=0.1)

    print("KERNEL_OK")
</pallas_src>

<mosaic_0001>
module attributes {stable_mosaic.version = 11 : i64} {
  func.func @_moe_kernel_shared_x(%arg0: i32, %arg1: i32, %arg2: memref<8x32xf32, #tpu.memory_space<vmem>>, %arg3: memref<2x32x32xf32, #tpu.memory_space<vmem>>, %arg4: memref<2x1x32xf32, #tpu.memory_space<vmem>>, %arg5: memref<2x8x32xf32, #tpu.memory_space<vmem>>) attributes {dimension_semantics = [#tpu.dimension_semantics<parallel>, #tpu.dimension_semantics<parallel>], iteration_bounds = array<i64: 2, 1>, scalar_prefetch = 0 : i64, scratch_operands = 0 : i64, tpu.core_type = #tpu.core_type<tc>, window_params = [{pipeline_mode = #tpu.pipeline_mode<synchronous>, transform_indices = @transform_0, window_bounds = array<i64: 8, 32>}, {transform_indices = @transform_1, window_bounds = array<i64: 2, 32, 32>}, {transform_indices = @transform_2, window_bounds = array<i64: 2, 1, 32>}, {transform_indices = @transform_3, window_bounds = array<i64: 2, 8, 32>}]} {
    %c0 = arith.constant 0 : index
    %c0_0 = arith.constant 0 : index
    %0 = vector.load %arg2[%c0, %c0_0] : memref<8x32xf32, #tpu.memory_space<vmem>>, vector<8x32xf32>
    %c0_1 = arith.constant 0 : index
    %c0_2 = arith.constant 0 : index
    %c0_3 = arith.constant 0 : index
    %1 = vector.load %arg3[%c0_1, %c0_2, %c0_3] : memref<2x32x32xf32, #tpu.memory_space<vmem>>, vector<1x32x32xf32>
    %2 = vector.shape_cast %1 : vector<1x32x32xf32> to vector<32x32xf32>
    %cst = arith.constant dense<0.000000e+00> : vector<8x32xf32>
    %3 = tpu.matmul %0, %2, %cst {dimension_numbers = #tpu.dot_dimension_numbers<[1], [0], [0], [1], [0, 0, 1, 1], [], []>} : vector<8x32xf32>, vector<32x32xf32>, vector<8x32xf32> -> vector<8x32xf32>
    %c0_4 = arith.constant 0 : index
    %c0_5 = arith.constant 0 : index
    %c0_6 = arith.constant 0 : index
    %4 = vector.load %arg4[%c0_4, %c0_5, %c0_6] : memref<2x1x32xf32, #tpu.memory_space<vmem>>, vector<1x1x32xf32>
    %5 = vector.shape_cast %4 : vector<1x1x32xf32> to vector<1x32xf32>
    %6 = vector.broadcast %5 : vector<1x32xf32> to vector<8x32xf32>
    %7 = arith.addf %3, %6 : vector<8x32xf32>
    %c0_7 = arith.constant 0 : index
    %c0_8 = arith.constant 0 : index
    %c0_9 = arith.constant 0 : index
    %8 = vector.load %arg5[%c0_7, %c0_8, %c0_9] : memref<2x8x32xf32, #tpu.memory_space<vmem>>, vector<1x8x32xf32>
    %9 = vector.shape_cast %8 : vector<1x8x32xf32> to vector<8x32xf32>
    %10 = vector.shape_cast %7 : vector<8x32xf32> to vector<1x8x32xf32>
    tpu.vector_store %arg5[%c0_7, %c0_8, %c0_9], %10 {strides = array<i32>} : memref<2x8x32xf32, #tpu.memory_space<vmem>>, vector<1x8x32xf32>,
    %c1 = arith.constant 1 : index
    %c0_10 = arith.constant 0 : index
    %c0_11 = arith.constant 0 : index
    %11 = vector.load %arg3[%c1, %c0_10, %c0_11] : memref<2x32x32xf32, #tpu.memory_space<vmem>>, vector<1x32x32xf32>
    %12 = vector.shape_cast %11 : vector<1x32x32xf32> to vector<32x32xf32>
    %cst_12 = arith.constant dense<0.000000e+00> : vector<8x32xf32>
    %13 = tpu.matmul %0, %12, %cst_12 {dimension_numbers = #tpu.dot_dimension_numbers<[1], [0], [0], [1], [0, 0, 1, 1], [], []>} : vector<8x32xf32>, vector<32x32xf32>, vector<8x32xf32> -> vector<8x32xf32>
    %c1_13 = arith.constant 1 : index
    %c0_14 = arith.constant 0 : index
    %c0_15 = arith.constant 0 : index
    %14 = vector.load %arg4[%c1_13, %c0_14, %c0_15] : memref<2x1x32xf32, #tpu.memory_space<vmem>>, vector<1x1x32xf32>
    %15 = vector.shape_cast %14 : vector<1x1x32xf32> to vector<1x32xf32>
    %16 = vector.broadcast %15 : vector<1x32xf32> to vector<8x32xf32>
    %17 = arith.addf %13, %16 : vector<8x32xf32>
    %c1_16 = arith.constant 1 : index
    %c0_17 = arith.constant 0 : index
    %c0_18 = arith.constant 0 : index
    %18 = vector.load %arg5[%c1_16, %c0_17, %c0_18] : memref<2x8x32xf32, #tpu.memory_space<vmem>>, vector<1x8x32xf32>
    %19 = vector.shape_cast %18 : vector<1x8x32xf32> to vector<8x32xf32>
    %20 = vector.shape_cast %17 : vector<8x32xf32> to vector<1x8x32xf32>
    tpu.vector_store %arg5[%c1_16, %c0_17, %c0_18], %20 {strides = array<i32>} : memref<2x8x32xf32, #tpu.memory_space<vmem>>, vector<1x8x32xf32>,
    return
  }
  func.func @transform_0(%arg0: i32, %arg1: i32) -> (i32, i32) {
    %c0_i32 = arith.constant 0 : i32
    %c0_i32_0 = arith.constant 0 : i32
    %c0_i32_1 = arith.constant 0 : i32
    return %c0_i32, %c0_i32_0 : i32, i32
  }
  func.func @transform_1(%arg0: i32, %arg1: i32) -> (i32, i32, i32) {
    %c0_i32 = arith.constant 0 : i32
    %c0_i32_0 = arith.constant 0 : i32
    return %arg0, %c0_i32, %arg1 : i32, i32, i32
  }
  func.func @transform_2(%arg0: i32, %arg1: i32) -> (i32, i32, i32) {
    %c0_i32 = arith.constant 0 : i32
    %c0_i32_0 = arith.constant 0 : i32
    return %arg0, %c0_i32, %arg1 : i32, i32, i32
  }
  func.func @transform_3(%arg0: i32, %arg1: i32) -> (i32, i32, i32) {
    %c0_i32 = arith.constant 0 : i32
    %c0_i32_0 = arith.constant 0 : i32
    return %arg0, %c0_i32, %arg1 : i32, i32, i32
  }
}

</mosaic_0001>

<llo_original>
// kernel: moe_linear.1
$region0: #{moe_linear.1}
  #allocation0 [shape = 'u32[]', space=smem, size = 0x4, offset = 0x4, fixed_abs, tag = 'smem constant byte address 0x4 - core index']
  #allocation1 [shape = 'u32[144,128]{1,0:T(1,128)}', space=vmem, size = 0x12000, scoped, tag = 'internal scratch']
  %s0 = inlined_call_operand.hbm [shape: f32[8,32], index: 0, kind: input, shape index: {}]
  %s1 = inlined_call_operand.hbm [shape: f32[4,32,32], index: 1, kind: input, shape index: {}]
  %s2 = inlined_call_operand.vmem [shape: f32[4,1,32], index: 2, kind: input, shape index: {}]
  %s3 = inlined_call_operand.hbm [shape: f32[4,8,32], index: 3, kind: output, shape index: {}]
  %s4 = sld [smem:[#allocation0]]
  $region53: #{moe_linear.1} parent=0
    _
  %s6 = ssub.s32 1, %s4
  %s7 = scalar_select 0, %s6, %s4
  $region1: #{moe_linear.1} parent=0
    #allocation2 [shape = 'u8[4096]{0}', space=vmem, size = 0x1000, scoped, tag = 'input window, operand 0, single buffered']
    #allocation3 [shape = 's32[2]{0}', space=sflag, size = 0x8, scoped, tag = 'scoped memory for moe_linear.1']
    #allocation4 [shape = 's32[2]{0}', space=sflag, size = 0x8, scoped, tag = 'scoped memory for moe_linear.1']
    #allocation5 [shape = 'u8[65536]{0}', space=vmem, size = 0x10000, scoped, tag = 'input window, operand 1']
    #allocation6 [shape = 's32[2]{0}', space=sflag, size = 0x8, scoped, tag = 'scoped memory for moe_linear.1']
    #allocation7 [shape = 'u8[16384]{0}', space=vmem, size = 0x4000, scoped, tag = 'output window, operand 0']
    %8 = vsyncpa [#allocation3], 0
    %9 = vsyncpa [#allocation6], 0
    %s10 = scalar_lea.sflag [#allocation6], 1
    %11 = vsyncpa %s10, 0
    %12 = vsyncpa [#allocation4], 0
    %s13 = scalar_lea.sflag [#allocation4], 1
    %14 = vsyncpa %s13, 0
    loop: start=0, step=1, limit=4
    $region2: #{moe_linear.1} parent=1 // loop_pre_header
      _
    $region3: #{moe_linear.1} parent=1 // loop_header
      %s16 = sphi 0, %s20
      %p17 = scmp.ge.s32.totalorder %s16, 4
      %s23 = sphi 0, %s35
      %s24 = sphi 0, %s31
      %s25 = sphi 0, %s23
      %s26 = sphi 0, %s24
      %s27 = sphi 0, %s25
      %s28 = sphi 0, %s26
      %s36 = sphi 0, %s36
      %s38 = sphi 0, %s36
      %s39 = sphi 0, %s38
      %s53 = sphi 0, %s39
      %s61 = sphi 0, %s63
      %s64 = sphi 0, %s61
      %s65 = sphi 0, %s64
      %s81 = sphi 0, %s65
      %s89 = sphi 0, %s91
      %s92 = sphi 0, %s89
      %s93 = sphi 0, %s92
      %s109 = sphi 0, %s93
      %s117 = sphi 0, %s119
      %s120 = sphi 0, %s117
      %s121 = sphi 0, %s120
      %s137 = sphi 0, %s121
    $region4: #{moe_linear.1} parent=1 // loop_header_branch
      %19 = sbr.rel (%p17) target = $region8
    $region5: #{moe_linear.1} parent=1 // loop_body
      %s21 = ssub.s32 %s16, 1
      %s22 = ssub.s32 %s16, 2
      %s29 = sadd.s32 1, %s24
      %p30 = scmp.ge.s32.totalorder %s29, 1
      %s31 = scalar_select %p30, 0, %s29
      %s32 = sadd.s32 1, %s23
      %s33 = scalar_select %p30, %s32, %s23
      %p34 = scmp.ge.s32.totalorder %s33, 2
      %s35 = scalar_select %p34, 0, %s33
      %s37 = sadd.s32 %s36, 1
      %p40 = scmp.eq.s32.totalorder %s16, 1
      %p41 = scmp.ne.s32.totalorder %s36, %s38
      %p42 = scmp.eq.s32.totalorder %s16, 0
      %p43 = por %p41, %p42
      %p44 = scmp.ne.s32.totalorder %s36, %s38
      %p45 = scmp.eq.s32.totalorder %s21, 1
      %p46 = por %p44, %p45
      %p47 = scmp.ne.s32.totalorder %s38, %s39
      %p48 = scmp.eq.s32.totalorder %s21, 0
      %p49 = por %p47, %p48
      %p50 = scmp.ne.s32.totalorder %s38, %s39
      %p51 = scmp.eq.s32.totalorder %s22, 1
      %p52 = por %p50, %p51
      %p54 = scmp.ne.s32.totalorder %s39, %s53
      %p55 = scmp.eq.s32.totalorder %s22, 0
      %p56 = por %p54, %p55
      %s57 = ssub.s32 %s23, %s35
      %s58 = ssub.s32 %s24, %s31
      %s59 = sor.u32 %s57, %s58
      %p60 = scmp.eq.s32.totalorder %s59, 0
      %s62 = sadd.s32 %s61, 1
      %s63 = scalar_select %p60, %s61, %s62
      %p66 = pneg %p60
      %p67 = scmp.eq.s32.totalorder %s16, 1
      %p68 = por %p66, %p67
      %p69 = scmp.ne.s32.totalorder %s61, %s64
      %p70 = scmp.eq.s32.totalorder %s16, 0
      %p71 = por %p69, %p70
      %p72 = scmp.ne.s32.totalorder %s61, %s64
      %p73 = scmp.eq.s32.totalorder %s21, 1
      %p74 = por %p72, %p73
      %p75 = scmp.ne.s32.totalorder %s64, %s65
      %p76 = scmp.eq.s32.totalorder %s21, 0
      %p77 = por %p75, %p76
      %p78 = scmp.ne.s32.totalorder %s64, %s65
      %p79 = scmp.eq.s32.totalorder %s22, 1
      %p80 = por %p78, %p79
      %p82 = scmp.ne.s32.totalorder %s65, %s81
      %p83 = scmp.eq.s32.totalorder %s22, 0
      %p84 = por %p82, %p83
      %s85 = ssub.s32 %s23, %s35
      %s86 = ssub.s32 %s24, %s31
      %s87 = sor.u32 %s85, %s86
      %p88 = scmp.eq.s32.totalorder %s87, 0
      %s90 = sadd.s32 %s89, 1
      %s91 = scalar_select %p88, %s89, %s90
      %p94 = pneg %p88
      %p95 = scmp.eq.s32.totalorder %s16, 1
      %p96 = por %p94, %p95
      %p97 = scmp.ne.s32.totalorder %s89, %s92
      %p98 = scmp.eq.s32.totalorder %s16, 0
      %p99 = por %p97, %p98
      %p100 = scmp.ne.s32.totalorder %s89, %s92
      %p101 = scmp.eq.s32.totalorder %s21, 1
      %p102 = por %p100, %p101
      %p103 = scmp.ne.s32.totalorder %s92, %s93
      %p104 = scmp.eq.s32.totalorder %s21, 0
      %p105 = por %p103, %p104
      %p106 = scmp.ne.s32.totalorder %s92, %s93
      %p107 = scmp.eq.s32.totalorder %s22, 1
      %p108 = por %p106, %p107
      %p110 = scmp.ne.s32.totalorder %s93, %s109
      %p111 = scmp.eq.s32.totalorder %s22, 0
      %p112 = por %p110, %p111
      %s113 = ssub.s32 %s23, %s35
      %s114 = ssub.s32 %s24, %s31
      %s115 = sor.u32 %s113, %s114
      %p116 = scmp.eq.s32.totalorder %s115, 0
      %s118 = sadd.s32 %s117, 1
      %s119 = scalar_select %p116, %s117, %s118
      %p122 = pneg %p116
      %p123 = scmp.eq.s32.totalorder %s16, 1
      %p124 = por %p122, %p123
      %p125 = scmp.ne.s32.totalorder %s117, %s120
      %p126 = scmp.eq.s32.totalorder %s16, 0
      %p127 = por %p125, %p126
      %p128 = scmp.ne.s32.totalorder %s117, %s120
      %p129 = scmp.eq.s32.totalorder %s21, 1
      %p130 = por %p128, %p129
      %p131 = scmp.ne.s32.totalorder %s120, %s121
      %p132 = scmp.eq.s32.totalorder %s21, 0
      %p133 = por %p131, %p132
      %p134 = scmp.ne.s32.totalorder %s120, %s121
      %p135 = scmp.eq.s32.totalorder %s22, 1
      %p136 = por %p134, %p135
      %p138 = scmp.ne.s32.totalorder %s121, %s137
      %p139 = scmp.eq.s32.totalorder %s22, 0
      %p140 = por %p138, %p139
      %p141 = scmp.le.s32.totalorder 1, %s16
      %p142 = scmp.lt.s32.totalorder %s16, 3
      %p143 = pnand %p141, %p142
      %p144 = pneg %p143
      // Predicated region
      $region9: #{moe_linear.1} parent=5 // pred_check
        _
      $region10: #{moe_linear.1} parent=5 // pred_check_branch
        %146 = sbr.rel (%p143) target = $region12
      $region11: #{moe_linear.1} parent=5 // pred_region
        %s147 = ssub.s32 %s16, 1
        // Predicated region
        $region13: #{moe_linear.1} parent=11 // pred_check
          %p148 = pneg %p49
        $region14: #{moe_linear.1} parent=11 // pred_check_branch
          %150 = sbr.rel (%p148) target = $region16
        $region15: #{moe_linear.1} parent=11 // pred_region
          %s152 = ssub.s32 128, 128
          %153 = vsyncadd [#allocation3], %s152
          %s155 = sshll.u32 [#allocation2], 4
          %s156 = int_to_ptr.vmem [resolvable:$true] %s155
          %158 = dma.hbm_to_vmem [thread:$0]  %s0, 128, %s156, [#allocation3]
        $region16: #{moe_linear.1} parent=11 // pred_fallthru
          _
      $region12: #{moe_linear.1} parent=5 // pred_fallthru
        _
      %p159 = scmp.lt.s32.totalorder %s16, 2
      // Predicated region
      $region17: #{moe_linear.1} parent=5 // pred_check
        %p160 = pneg %p159
      $region18: #{moe_linear.1} parent=5 // pred_check_branch
        %162 = sbr.rel (%p160) target = $region20
      $region19: #{moe_linear.1} parent=5 // pred_region
        // Predicated region
        $region21: #{moe_linear.1} parent=19 // pred_check
          %p163 = pneg %p71
        $region22: #{moe_linear.1} parent=19 // pred_check_branch
          %165 = sbr.rel (%p163) target = $region24
        $region23: #{moe_linear.1} parent=19 // pred_region
          %s166 = sand.u32 %s61, 1
          %s167 = scalar_lea.sflag [#allocation6], %s166
          %s168 = sand.u32 %s61, 1
          %s169 = smul.addr %s168, 64
          %s170 = scalar_lea.vmem [#allocation5], %s169
          %s171 = smul.u32 2, %s23
          %s173 = ssub.s32 1024, 1024
          %174 = vsyncadd %s167, %s173
          %s175 = smul.addr %s171, 4
          %s176 = sadd.s32 %s24, %s175
          %s177 = smul.addr %s176, 128
          %s178 = scalar_lea.hbm %s1, %s177
          %s179 = sshll.u32 %s170, 4
          %s180 = int_to_ptr.vmem [resolvable:$true] %s179
          %185 = dma.hbm_to_vmem [thread:$0]  %s178, 1024, %s180, %s167, 128, 128, 8
        $region24: #{moe_linear.1} parent=19 // pred_fallthru
          _
        // Predicated region
        $region25: #{moe_linear.1} parent=19 // pred_check
          %p186 = pneg %p99
        $region26: #{moe_linear.1} parent=19 // pred_check_branch
          %188 = sbr.rel (%p186) target = $region28
        $region27: #{moe_linear.1} parent=19 // pred_region
          %s189 = smul.u32 2, %s23
          %p190 = scmp.lt.s32.totalorder %s189, 3
          %s191 = scalar_select %p190, %s189, 3
          %p192 = scmp.lt.s32.totalorder %s24, 0
          %s193 = scalar_select %p192, %s24, 0
          %s194 = sadd.s32 %s193, %s191
          %s195 = scalar_lea.vmem %s2, %s194
          %s196 = smul.u32 2, %s23
        $region28: #{moe_linear.1} parent=19 // pred_fallthru
          _
      $region20: #{moe_linear.1} parent=5 // pred_fallthru
        _
      %p197 = scmp.le.s32.totalorder 1, %s16
      %p198 = scmp.lt.s32.totalorder %s16, 3
      %p199 = pnand %p197, %p198
      %p200 = pneg %p199
      // Predicated region
      $region29: #{moe_linear.1} parent=5 // pred_check
        _
      $region30: #{moe_linear.1} parent=5 // pred_check_branch
        %202 = sbr.rel (%p199) target = $region32
      $region31: #{moe_linear.1} parent=5 // pred_region
        %s203 = ssub.s32 %s16, 1
        // Predicated region
        $region33: #{moe_linear.1} parent=31 // pred_check
          %p204 = pneg %p49
        $region34: #{moe_linear.1} parent=31 // pred_check_branch
          %206 = sbr.rel (%p204) target = $region36
        $region35: #{moe_linear.1} parent=31 // pred_region
          %207 = dma.done [#allocation3], 128
        $region36: #{moe_linear.1} parent=31 // pred_fallthru
          _
        %s208 = sand.u32 %s64, 1
        %s209 = scalar_lea.sflag [#allocation6], %s208
        %s210 = sand.u32 %s64, 1
        %s211 = smul.addr %s210, 64
        %s212 = scalar_lea.vmem [#allocation5], %s211
        // Predicated region
        $region37: #{moe_linear.1} parent=31 // pred_check
          %p213 = pneg %p77
        $region38: #{moe_linear.1} parent=31 // pred_check_branch
          %215 = sbr.rel (%p213) target = $region40
        $region39: #{moe_linear.1} parent=31 // pred_region
          %216 = dma.done %s209, 1024
        $region40: #{moe_linear.1} parent=31 // pred_fallthru
          _
        %p217 = pneg %p49
        %p218 = pneg %p46
        %s219 = sand.u32 %s64, 1
        %s220 = scalar_lea.sflag [#allocation6], %s219
        %s221 = sand.u32 %s64, 1
        %s222 = smul.addr %s221, 64
        %s223 = scalar_lea.vmem [#allocation5], %s222
        %p224 = pneg %p77
        %p225 = pneg %p74
        %s226 = smul.u32 2, %s25
        %p227 = scmp.lt.s32.totalorder %s226, 3
        %s228 = scalar_select %p227, %s226, 3
        %p229 = scmp.lt.s32.totalorder %s26, 0
        %s230 = scalar_select %p229, %s26, 0
        %s231 = sadd.s32 %s230, %s228
        %s232 = scalar_lea.vmem %s2, %s231
        %p233 = pneg %p105
        %p234 = pneg %p102
        %p235 = pneg %p133
        %p236 = pneg %p130
        %s237 = sand.u32 %s120, 1
        %s238 = scalar_lea.sflag [#allocation4], %s237
        %s239 = sand.u32 %s120, 1
        %s240 = smul.addr %s239, 16
        %s241 = scalar_lea.vmem [#allocation7], %s240
        %s242 = smul.u32 2, %s25
        %s243 = smul.u32 2, %s25
        %p244 = scmp.lt.s32.totalorder %s243, 3
        %s245 = scalar_select %p244, %s243, 3
        %p246 = scmp.lt.s32.totalorder %s26, 0
        %s247 = scalar_select %p246, %s26, 0
        %s248 = sadd.s32 %s247, %s245
        %s249 = scalar_lea.vmem %s2, %s248
        %s250 = smul.u32 2, %s25
        %s251 = smul.u32 2, %s25
        %v252 = vld [vmem:[#allocation2] sm:$0xff]
        %v253 = vld [vmem:[%s212] sm:$0xff]
        %v254 = vld [vmem:[%s212 + $0x8] sm:$0xff]
        %v255 = vld [vmem:[%s212 + $0x10] sm:$0xff]
        %v256 = vld [vmem:[%s212 + $0x18] sm:$0xff]
        %v257 = vld [vmem:[%s249] sm:$0x1]
        %v259 = vlaneseq
        %v260 = vshrl.u32 %v259, 7
        %v261 = vsub.s32 0, %v260
        %v262 = vrot.slane %v257, %v261
        %vm264 = vcmask 261120
        %v266 = vsel %vm264, %v252, 0
        %268 = vmatprep.subr.mxu0 0.0
        %269 = vmatpush1.msra.mxu0 %v253
        %270 = vmatprep.subr.mxu0 0.0
        %271 = vmatpush1.msra.mxu0 %v254
        %272 = vmatprep.subr.mxu0 0.0
        %273 = vmatpush1.msra.mxu0 %v255
        %274 = vmatprep.subr.mxu0 0.0
        %275 = vmatpush1.msra.mxu0 %v256
        %276 = vmatprep.subr.mxu0 0.0
        %277 = vmatpush1.msra.mxu0 0.0
        %278 = vmatprep.subr.mxu0 0.0
        %279 = vmatpush1.msra.mxu0 0.0
        %280 = vmatprep.subr.mxu0 0.0
        %281 = vmatpush1.msra.mxu0 0.0
        %282 = vmatprep.subr.mxu0 0.0
        %283 = vmatpush1.msra.mxu0 0.0
        %284 = vmatprep.subr.mxu0 0.0
        %285 = vmatpush1.msra.mxu0 0.0
        %286 = vmatprep.subr.mxu0 0.0
        %287 = vmatpush1.msra.mxu0 0.0
        %288 = vmatprep.subr.mxu0 0.0
        %289 = vmatpush1.msra.mxu0 0.0
        %290 = vmatprep.subr.mxu0 0.0
        %291 = vmatpush1.msra.mxu0 0.0
        %292 = vmatprep.subr.mxu0 0.0
        %293 = vmatpush1.msra.mxu0 0.0
        %294 = vmatprep.subr.mxu0 0.0
        %295 = vmatpush1.msra.mxu0 0.0
        %296 = vmatprep.subr.mxu0 0.0
        %297 = vmatpush1.msra.mxu0 0.0
        %298 = vmatprep.subr.mxu0 0.0
        %299 = vmatpush1.msra.mxu0 0.0
        %300 = vmatprep.subr.mxu0 0.0
        %301 = vmatpush1.msra.mxu0 0.0
        %302 = vmatprep.subr.mxu0 0.0
        %303 = vmatpush1.msra.mxu0 0.0
        %304 = vmatprep.subr.mxu0 0.0
        %305 = vmatpush1.msra.mxu0 0.0
        %306 = vmatprep.subr.mxu0 0.0
        %307 = vmatpush1.msra.mxu0 0.0
        %308 = vmatprep.subr.mxu0 0.0
        %309 = vmatpush1.msra.mxu0 0.0
        %310 = vmatprep.subr.mxu0 0.0
        %311 = vmatpush1.msra.mxu0 0.0
        %312 = vmatprep.subr.mxu0 0.0
        %313 = vmatpush1.msra.mxu0 0.0
        %314 = vmatprep.subr.mxu0 0.0
        %315 = vmatpush1.msra.mxu0 0.0
        %316 = vmatprep.subr.mxu0 0.0
        %317 = vmatpush1.msra.mxu0 0.0
        %318 = vmatprep.subr.mxu0 0.0
        %319 = vmatpush1.msra.mxu0 0.0
        %320 = vmatprep.subr.mxu0 0.0
        %321 = vmatpush1.msra.mxu0 0.0
        %322 = vmatprep.subr.mxu0 0.0
        %323 = vmatpush1.msra.mxu0 0.0
        %324 = vmatprep.subr.mxu0 0.0
        %325 = vmatpush1.msra.mxu0 0.0
        %326 = vmatprep.subr.mxu0 0.0
        %327 = vmatpush1.msra.mxu0 0.0
        %328 = vmatprep.subr.mxu0 0.0
        %329 = vmatpush1.msra.mxu0 0.0
        %330 = vmatprep.subr.mxu0 0.0
        %331 = vmatpush1.msra.mxu0 0.0
        %332 = vmatprep.mubr.f32.mxu0 0.0
        %333 = vmatmul.mubr.f32.gmra.mrb[0].mxu0 %v266
        %v334 = vpop.f32.mrb[0].mxu0
        %v335 = vadd.f32 %v262, %v334
        %v336 = vpop.f32.mrb[0].mxu0
        %337 = vdwg.mxu0
        %338 = vst.msk [vmem:[%s241] sm:$0xff] %vm264, %v335
        %s339 = scalar_lea.vmem %s212, 32 [#allocation5]
        %v340 = vld [vmem:[%s339] sm:$0xff]
        %v341 = vld [vmem:[%s339 + $0x8] sm:$0xff]
        %v342 = vld [vmem:[%s339 + $0x10] sm:$0xff]
        %v343 = vld [vmem:[%s339 + $0x18] sm:$0xff]
        %s344 = scalar_lea.vmem %s249, 1
        %v345 = vld [vmem:[%s344] sm:$0x1]
        %v347 = vlaneseq
        %v348 = vshrl.u32 %v347, 7
        %v349 = vsub.s32 0, %v348
        %v350 = vrot.slane %v345, %v349
        %352 = vmatprep.subr.mxu0 0.0
        %353 = vmatpush1.msra.mxu0 %v340
        %354 = vmatprep.subr.mxu0 0.0
        %355 = vmatpush1.msra.mxu0 %v341
        %356 = vmatprep.subr.mxu0 0.0
        %357 = vmatpush1.msra.mxu0 %v342
        %358 = vmatprep.subr.mxu0 0.0
        %359 = vmatpush1.msra.mxu0 %v343
        %360 = vmatprep.subr.mxu0 0.0
        %361 = vmatpush1.msra.mxu0 0.0
        %362 = vmatprep.subr.mxu0 0.0
        %363 = vmatpush1.msra.mxu0 0.0
        %364 = vmatprep.subr.mxu0 0.0
        %365 = vmatpush1.msra.mxu0 0.0
        %366 = vmatprep.subr.mxu0 0.0
        %367 = vmatpush1.msra.mxu0 0.0
        %368 = vmatprep.subr.mxu0 0.0
        %369 = vmatpush1.msra.mxu0 0.0
        %370 = vmatprep.subr.mxu0 0.0
        %371 = vmatpush1.msra.mxu0 0.0
        %372 = vmatprep.subr.mxu0 0.0
        %373 = vmatpush1.msra.mxu0 0.0
        %374 = vmatprep.subr.mxu0 0.0
        %375 = vmatpush1.msra.mxu0 0.0
        %376 = vmatprep.subr.mxu0 0.0
        %377 = vmatpush1.msra.mxu0 0.0
        %378 = vmatprep.subr.mxu0 0.0
        %379 = vmatpush1.msra.mxu0 0.0
        %380 = vmatprep.subr.mxu0 0.0
        %381 = vmatpush1.msra.mxu0 0.0
        %382 = vmatprep.subr.mxu0 0.0
        %383 = vmatpush1.msra.mxu0 0.0
        %384 = vmatprep.subr.mxu0 0.0
        %385 = vmatpush1.msra.mxu0 0.0
        %386 = vmatprep.subr.mxu0 0.0
        %387 = vmatpush1.msra.mxu0 0.0
        %388 = vmatprep.subr.mxu0 0.0
        %389 = vmatpush1.msra.mxu0 0.0
        %390 = vmatprep.subr.mxu0 0.0
        %391 = vmatpush1.msra.mxu0 0.0
        %392 = vmatprep.subr.mxu0 0.0
        %393 = vmatpush1.msra.mxu0 0.0
        %394 = vmatprep.subr.mxu0 0.0
        %395 = vmatpush1.msra.mxu0 0.0
        %396 = vmatprep.subr.mxu0 0.0
        %397 = vmatpush1.msra.mxu0 0.0
        %398 = vmatprep.subr.mxu0 0.0
        %399 = vmatpush1.msra.mxu0 0.0
        %400 = vmatprep.subr.mxu0 0.0
        %401 = vmatpush1.msra.mxu0 0.0
        %402 = vmatprep.subr.mxu0 0.0
        %403 = vmatpush1.msra.mxu0 0.0
        %404 = vmatprep.subr.mxu0 0.0
        %405 = vmatpush1.msra.mxu0 0.0
        %406 = vmatprep.subr.mxu0 0.0
        %407 = vmatpush1.msra.mxu0 0.0
        %408 = vmatprep.subr.mxu0 0.0
        %409 = vmatpush1.msra.mxu0 0.0
        %410 = vmatprep.subr.mxu0 0.0
        %411 = vmatpush1.msra.mxu0 0.0
        %412 = vmatprep.subr.mxu0 0.0
        %413 = vmatpush1.msra.mxu0 0.0
        %414 = vmatprep.subr.mxu0 0.0
        %415 = vmatpush1.msra.mxu0 0.0
        %416 = vmatprep.mubr.f32.mxu0 0.0
        %417 = vmatmul.mubr.f32.gmra.mrb[0].mxu0 %v266
        %v418 = vpop.f32.mrb[0].mxu0
        %v419 = vadd.f32 %v350, %v418
        %v420 = vpop.f32.mrb[0].mxu0
        %421 = vdwg.mxu0
        %s422 = scalar_lea.vmem %s241, 8 [#allocation7]
        %423 = vst.msk [vmem:[%s422] sm:$0xff] %vm264, %v419
        %s424 = sand.u32 %s120, 1
        %s425 = scalar_lea.sflag [#allocation4], %s424
        %s426 = sand.u32 %s120, 1
        %s427 = smul.addr %s426, 16
        %s428 = scalar_lea.vmem [#allocation7], %s427
        // Predicated region
        $region41: #{moe_linear.1} parent=31 // pred_check
          %p429 = pneg %p130
        $region42: #{moe_linear.1} parent=31 // pred_check_branch
          %431 = sbr.rel (%p429) target = $region44
        $region43: #{moe_linear.1} parent=31 // pred_region
          %s432 = smul.u32 2, %s25
          %s434 = ssub.s32 256, 256
          %435 = vsyncadd %s425, %s434
          %s436 = sadd.s32 %s26, %s432
          %s437 = smul.addr %s436, 128
          %s438 = scalar_lea.hbm %s3, %s437
          %s439 = sshll.u32 %s428, 4
          %s440 = int_to_ptr.vmem [resolvable:$true] %s439
          %445 = dma.vmem_to_hbm [thread:$0]  %s440, 256, %s438, %s425, 128, 128, 8
        $region44: #{moe_linear.1} parent=31 // pred_fallthru
          _
      $region32: #{moe_linear.1} parent=5 // pred_fallthru
        _
      %p446 = scmp.le.s32.totalorder 2, %s16
      // Predicated region
      $region45: #{moe_linear.1} parent=5 // pred_check
        %p447 = pneg %p446
      $region46: #{moe_linear.1} parent=5 // pred_check_branch
        %449 = sbr.rel (%p447) target = $region48
      $region47: #{moe_linear.1} parent=5 // pred_region
        %s450 = ssub.s32 %s16, 2
        // Predicated region
        $region49: #{moe_linear.1} parent=47 // pred_check
          %p451 = pneg %p136
        $region50: #{moe_linear.1} parent=47 // pred_check_branch
          %453 = sbr.rel (%p451) target = $region52
        $region51: #{moe_linear.1} parent=47 // pred_region
          %s454 = sand.u32 %s121, 1
          %s455 = scalar_lea.sflag [#allocation4], %s454
          %s456 = sand.u32 %s121, 1
          %s457 = smul.addr %s456, 16
          %s458 = scalar_lea.vmem [#allocation7], %s457
          %459 = dma.done %s455, 256
        $region52: #{moe_linear.1} parent=47 // pred_fallthru
          _
      $region48: #{moe_linear.1} parent=5 // pred_fallthru
        _
    $region6: #{moe_linear.1} parent=1 // loop_footer
      %s20 = sadd.s32 1, %s16
    $region7: #{moe_linear.1} parent=1 // loop_footer_branch
      %15 = sbr.rel target = $region3
    $region8: #{moe_linear.1} parent=1 // loop_exit
      _
    %460 = vsyncpa [#allocation3], 1
    %s461 = scalar_lea.sflag [#allocation3], 1
    %462 = vsyncpa %s461, 1
    %463 = vsyncpa [#allocation6], 1
    %s464 = scalar_lea.sflag [#allocation6], 1
    %465 = vsyncpa %s464, 1
    %466 = vsyncpa [#allocation4], 1
    %s467 = scalar_lea.sflag [#allocation4], 1
    %468 = vsyncpa %s467, 1

</llo_original>
